<compile_context>
chip_gen: v5e
topology: v5e:2x2
jax: 0.10.0
libtpu: 0.0.40
codegen_flags: <defaults>
</compile_context>

<pallas_src>
import functools

import numpy as np
import jax
import jax.numpy as jnp
from jax.experimental import pallas as pl
from jax.experimental.pallas import tpu as pltpu


_NEG = -1e30  # finite masked-logit sentinel; QK^T logits are kept in f32.


# ----------------------------------------------------------------------------
# host-side helpers (all O(N) or O(D))
# ----------------------------------------------------------------------------

def _pick_row_tile(n, preferred=512):
    """Largest power-of-two tile <= preferred that divides n (else full n)."""
    for t in (1024, 512, 256, 128, 64, 32, 16, 8):
        if t <= preferred and n % t == 0:
            return t
    return n


def _pick_tq_d(D, HW, preferred_rows=256):
    """Largest divisor of D such that tq_d * H * W <= preferred row count."""
    best = 1
    for t in range(1, D + 1):
        if D % t == 0 and t * HW <= max(HW, preferred_rows):
            best = t
    return best


@functools.lru_cache(maxsize=None)
def _neighborhood_index_arrays(D, H, W, kd, kh, kw):
    """Per-query clamped window starts (N, 3) and per-plane key (h, w) coords (2, H*W)."""
    def starts(L, ksz):
        assert L >= ksz, "spatial extent must be >= kernel size"
        return np.clip(np.arange(L) - ksz // 2, 0, L - ksz)

    dd, hh, ww = np.meshgrid(np.arange(D), np.arange(H), np.arange(W), indexing="ij")
    q_starts = np.stack(
        [starts(D, kd)[dd], starts(H, kh)[hh], starts(W, kw)[ww]],
        axis=-1).reshape(D * H * W, 3).astype(np.int32)
    hh2, ww2 = np.meshgrid(np.arange(H), np.arange(W), indexing="ij")
    khw = np.stack([hh2.reshape(-1), ww2.reshape(-1)], axis=0).astype(np.int32)
    return jnp.asarray(q_starts), jnp.asarray(khw)


@functools.lru_cache(maxsize=None)
def _band_plane_starts(D, kd, tq_d):
    """First key depth-plane of the neighborhood band for each q depth-slab.

    Queries in depth planes [d0, d0 + tq_d) have all their valid keys inside the
    contiguous plane band [start, start + band_len) with band_len = tq_d + kd - 1
    (window starts are 1-Lipschitz in d); start is clamped so the band fits in [0, D).
    """
    band_len = min(D, tq_d + kd - 1)
    d0 = np.arange(0, D, tq_d)
    s = np.clip(d0 - kd // 2, 0, D - kd)          # window start of the slab's first query
    bs = np.clip(np.minimum(s, D - band_len), 0, None)
    return jnp.asarray(bs.astype(np.int32)), int(band_len)


# ----------------------------------------------------------------------------
# fused QKV projection: one (tm, C) @ (C, 3C) MXU pass
# ----------------------------------------------------------------------------

def _qkv_proj_kernel(x_ref, w_ref, b_ref, q_ref, k_ref, v_ref, *, dim):
    y = jnp.dot(x_ref[...], w_ref[...],
                preferred_element_type=jnp.float32) + b_ref[...]
    q_ref[...] = y[:, :dim].astype(q_ref.dtype)
    k_ref[...] = y[:, dim:2 * dim].astype(k_ref.dtype)
    v_ref[...] = y[:, 2 * dim:].astype(v_ref.dtype)


def pallas_qkv_proj(x, w_qkv, b_qkv, *, tm=None):
    """x: (B, N, C) @ (C, 3C) -> q, k, v each (B, N, C); row-tiled & pipelined."""
    B, N, C = x.shape
    assert w_qkv.shape == (C, 3 * C)
    tm = tm if tm is not None else _pick_row_tile(N, 512)
    row = pl.BlockSpec((None, tm, C), lambda b, i: (b, i, 0))
    out_sd = jax.ShapeDtypeStruct((B, N, C), x.dtype)
    return pl.pallas_call(
        functools.partial(_qkv_proj_kernel, dim=C),
        out_shape=(out_sd, out_sd, out_sd),
        grid=(B, N // tm),
        in_specs=[row,
                  pl.BlockSpec((C, 3 * C), lambda b, i: (0, 0)),
                  pl.BlockSpec((1, 3 * C), lambda b, i: (0, 0))],
        out_specs=(row, row, row),
        compiler_params=pltpu.CompilerParams(
            dimension_semantics=("parallel", "parallel")),
    )(x, w_qkv, b_qkv.reshape(1, 3 * C))


# ----------------------------------------------------------------------------
# band-limited neighborhood attention + fused output projection
# ----------------------------------------------------------------------------

def _na_band_kernel(band_ref, qs_ref, khw_ref, q_ref, k_ref, v_ref, wp_ref, bp_ref,
                    o_ref, m_sc, l_sc, acc_sc, *, num_heads, head_dim, kernel_size):
    kd, kh, kw = kernel_size
    qi = pl.program_id(1)                     # q depth-slab index
    r = pl.program_id(2)                      # key plane index within the band

    @pl.when(r == 0)
    def _():
        m_sc[...] = jnp.full_like(m_sc, _NEG)
        l_sc[...] = jnp.zeros_like(l_sc)
        acc_sc[...] = jnp.zeros_like(acc_sc)

    qs = qs_ref[...]                          # (tq, 3) clamped window starts per query
    khw = khw_ref[...]                        # (2, HW) key (h, w) coords within a plane
    dk = band_ref[qi] + r                     # depth of this key plane (SMEM scalar)

    d_ok = (dk >= qs[:, 0:1]) & (dk < qs[:, 0:1] + kd)                       # (tq, 1)
    h_ok = (khw[0:1, :] >= qs[:, 1:2]) & (khw[0:1, :] < qs[:, 1:2] + kh)     # (tq, HW)
    w_ok = (khw[1:2, :] >= qs[:, 2:3]) & (khw[1:2, :] < qs[:, 2:3] + kw)     # (tq, HW)
    mask = d_ok & h_ok & w_ok                                                # (tq, HW)

    q = q_ref[...]                            # (tq, C)  bf16, both scales folded into W_q
    k = k_ref[...]                            # (HW, C)  bf16, current key plane
    v = v_ref[...]                            # (HW, C)  bf16

    for h in range(num_heads):
        sl = slice(h * head_dim, (h + 1) * head_dim)
        # contract on head_dim -> no in-kernel transpose; logits accumulated in f32.
        s = jax.lax.dot_general(q[:, sl], k[:, sl], (((1,), (1,)), ((), ())),
                                preferred_element_type=jnp.float32)          # (tq, HW)
        s = jnp.where(mask, s, _NEG)
        m_prev = m_sc[:, h:h + 1]
        m_new = jnp.maximum(m_prev, jnp.max(s, axis=-1, keepdims=True))
        alpha = jnp.exp(m_prev - m_new)
        p = jnp.where(mask, jnp.exp(s - m_new), 0.0)
        l_sc[:, h:h + 1] = alpha * l_sc[:, h:h + 1] + jnp.sum(p, -1, keepdims=True)
        acc_sc[:, sl] = alpha * acc_sc[:, sl] + jnp.dot(
            p.astype(v.dtype), v[:, sl], preferred_element_type=jnp.float32)
        m_sc[:, h:h + 1] = m_new

    @pl.when(r == pl.num_programs(2) - 1)
    def _():
        # normalize each head in place, then fuse the output projection (epilogue).
        for h in range(num_heads):
            sl = slice(h * head_dim, (h + 1) * head_dim)
            acc_sc[:, sl] = acc_sc[:, sl] * pl.reciprocal(l_sc[:, h:h + 1], approx=True)
        y = jnp.dot(acc_sc[...].astype(wp_ref.dtype), wp_ref[...],
                    preferred_element_type=jnp.float32) + bp_ref[...]
        o_ref[...] = y.astype(o_ref.dtype)


def pallas_na3d_proj(q, k, v, w_proj, b_proj, q_starts, khw, band_start, *,
                     num_heads, kernel_size, spatial, tq_d, band_len):
    """Band-limited neighborhood attention with fused output projection.

    q, k, v: (B, N, C), heads packed into channels.  Returns (B, N, C).
    """
    B, N, C = q.shape
    D, H, W = spatial
    HW = H * W
    tq = tq_d * HW
    head_dim = C // num_heads
    n_qtiles = D // tq_d

    kern = functools.partial(_na_band_kernel, num_heads=num_heads,
                             head_dim=head_dim, kernel_size=tuple(kernel_size))
    grid_spec = pltpu.PrefetchScalarGridSpec(
        num_scalar_prefetch=1,                           # band_start -> SMEM
        grid=(B, n_qtiles, band_len),
        in_specs=[
            pl.BlockSpec((tq, 3), lambda b, i, r, bs: (i, 0)),           # q window starts
            pl.BlockSpec((2, HW), lambda b, i, r, bs: (0, 0)),           # plane (h,w) coords
            pl.BlockSpec((None, tq, C), lambda b, i, r, bs: (b, i, 0)),  # q slab
            pl.BlockSpec((None, HW, C), lambda b, i, r, bs: (b, bs[i] + r, 0)),  # K plane
            pl.BlockSpec((None, HW, C), lambda b, i, r, bs: (b, bs[i] + r, 0)),  # V plane
            pl.BlockSpec((C, C), lambda b, i, r, bs: (0, 0)),            # w_proj (resident)
            pl.BlockSpec((1, C), lambda b, i, r, bs: (0, 0)),            # b_proj
        ],
        out_specs=pl.BlockSpec((None, tq, C), lambda b, i, r, bs: (b, i, 0)),
        scratch_shapes=[
            pltpu.VMEM((tq, num_heads), jnp.float32),    # running max per head
            pltpu.VMEM((tq, num_heads), jnp.float32),    # running denom per head
            pltpu.VMEM((tq, C), jnp.float32),            # running numerator (lane-dense)
        ],
    )
    return pl.pallas_call(
        kern,
        out_shape=jax.ShapeDtypeStruct((B, N, C), q.dtype),
        grid_spec=grid_spec,
        compiler_params=pltpu.CompilerParams(
            dimension_semantics=("parallel", "parallel", "arbitrary")),
    )(band_start, q_starts, khw, q, k, v, w_proj, b_proj.reshape(1, C))


# ----------------------------------------------------------------------------
# Module
# ----------------------------------------------------------------------------

class CustomNeighborhoodAttention3DPallas:
    def __init__(self, dim, num_heads, kernel_size, dilation=1, is_causal=False,
                 qkv_bias=True, qk_scale=None, seed=0, compute_dtype=jnp.bfloat16):
        assert dilation == 1
        assert not is_causal
        if isinstance(kernel_size, int):
            kernel_size = (kernel_size,) * 3
        assert all(ks % 2 == 1 for ks in kernel_size), "NATTEN requires odd kernel sizes"
        self.dim = dim
        self.num_heads = num_heads
        self.head_dim = dim // num_heads
        self.scale = qk_scale or self.head_dim ** (-0.5)      # module-level q scale
        self.inner_scale = self.head_dim ** (-0.5)            # tuned_na3d default scale
        self.kernel_size = tuple(kernel_size)
        self.compute_dtype = compute_dtype

        key = jax.random.PRNGKey(seed)
        k1, k2, k3, k4 = jax.random.split(key, 4)
        # raw f32 parameters, (in, out) layout so kernels compute x @ W + b
        self.w_qkv = 0.02 * jax.random.normal(k1, (dim, 3 * dim), jnp.float32)
        self.b_qkv = (0.02 * jax.random.normal(k2, (3 * dim,), jnp.float32)
                      if qkv_bias else jnp.zeros((3 * dim,), jnp.float32))
        self.w_proj = 0.02 * jax.random.normal(k3, (dim, dim), jnp.float32)
        self.b_proj = 0.02 * jax.random.normal(k4, (dim,), jnp.float32)

        # Fold the PRODUCT of both scales (PyTorch applies self.scale AND tuned_na3d
        # applies head_dim**-0.5 again) into the q columns; cast kernel params to bf16.
        st = self.scale * self.inner_scale
        col_scale = jnp.concatenate([jnp.full((dim,), st, jnp.float32),
                                     jnp.ones((2 * dim,), jnp.float32)])
        self.w_qkv_k = (self.w_qkv * col_scale[None, :]).astype(compute_dtype)
        self.b_qkv_k = (self.b_qkv * col_scale).astype(compute_dtype)
        self.w_proj_k = self.w_proj.astype(compute_dtype)
        self.b_proj_k = self.b_proj.astype(compute_dtype)
        # TODO(synk): attn_drop / proj_drop are identity in eval mode; Liere /
        # RotaryEmbedding embedding_module branches are not needed for embed_mod=None.

    def __call__(self, x):
        if x.ndim != 5:
            raise ValueError("expected a rank-5 input tensor (B, D, H, W, C)")
        B, D, H, W, C = x.shape
        assert C == self.dim
        kd, kh, kw = self.kernel_size
        assert D >= kd and H >= kh and W >= kw
        HW = H * W
        assert HW % 8 == 0, "H*W must be a multiple of 8 (TPU sublane tiling)"
        N = D * HW

        q_starts, khw = _neighborhood_index_arrays(D, H, W, kd, kh, kw)
        tq_d = _pick_tq_d(D, HW)
        band_start, band_len = _band_plane_starts(D, kd, tq_d)

        xf = x.reshape(B, N, C).astype(self.compute_dtype)
        q, k, v = pallas_qkv_proj(xf, self.w_qkv_k, self.b_qkv_k)
        y = pallas_na3d_proj(q, k, v, self.w_proj_k, self.b_proj_k,
                             q_starts, khw, band_start,
                             num_heads=self.num_heads, kernel_size=self.kernel_size,
                             spatial=(D, H, W), tq_d=tq_d, band_len=band_len)
        return y.reshape(B, D, H, W, C).astype(x.dtype)


# ----------------------------------------------------------------------------
# Pure-JAX f32 reference (raw unscaled weights, dense mask) for a sanity check
# ----------------------------------------------------------------------------

def _dense_neighborhood_mask_reference(D, H, W, kd, kh, kw):
    def axis_window(L, ksz):
        i = jnp.arange(L)
        start = jnp.clip(i - ksz // 2, 0, L - ksz)
        j = jnp.arange(L)
        return (j[None, :] >= start[:, None]) & (j[None, :] < start[:, None] + ksz)

    md, mh, mw = axis_window(D, kd), axis_window(H, kh), axis_window(W, kw)
    m = (md[:, None, None, :, None, None]
         & mh[None, :, None, None, :, None]
         & mw[None, None, :, None, None, :]).reshape(D * H * W, D * H * W)
    return jnp.where(m, 0.0, _NEG).astype(jnp.float32)


def reference_forward(mod, x):
    B, D, H, W, C = x.shape
    N = D * H * W
    xf = x.reshape(B * N, C)
    qkv = xf @ mod.w_qkv + mod.b_qkv
    qkv = qkv.reshape(B, N, 3, mod.num_heads, mod.head_dim)
    q = jnp.transpose(qkv[:, :, 0], (0, 2, 1, 3)) * mod.scale
    k = jnp.transpose(qkv[:, :, 1], (0, 2, 1, 3))
    v = jnp.transpose(qkv[:, :, 2], (0, 2, 1, 3))
    mask = _dense_neighborhood_mask_reference(D, H, W, *mod.kernel_size)
    s = jnp.einsum("bhqd,bhkd->bhqk", q * mod.inner_scale, k) + mask[None, None]
    p = jax.nn.softmax(s, axis=-1)
    o = jnp.einsum("bhqk,bhkd->bhqd", p, v)
    o = jnp.transpose(o, (0, 2, 1, 3)).reshape(B * N, C)
    y = o @ mod.w_proj + mod.b_proj
    return y.reshape(B, D, H, W, C)


if __name__ == "__main__":
    # D=6 with kernel depth 3 and tq_d=3 gives non-trivial key bands (band_len=5 < D).
    B, D, H, W, C = 2, 6, 8, 8, 32
    num_heads = 4
    kernel_size = (3, 3, 3)

    x = jax.random.normal(jax.random.PRNGKey(0), (B, D, H, W, C), jnp.float32)

    mod = CustomNeighborhoodAttention3DPallas(
        dim=C, num_heads=num_heads, kernel_size=kernel_size, seed=0)

    y = jax.block_until_ready(mod(x))
    y_ref = reference_forward(mod, x)

    assert y.shape == (B, D, H, W, C)
    y32 = y.astype(jnp.float32)
    err = float(jnp.max(jnp.abs(y32 - y_ref)))
    # tolerance covers bf16 activations/weights + pl.reciprocal(approx=True)
    assert jnp.allclose(y32, y_ref, atol=3e-3, rtol=3e-2), err
    print("KERNEL_OK")
</pallas_src>

<mosaic_0001>
module attributes {stable_mosaic.version = 11 : i64} {
  func.func @_qkv_proj_kernel(%arg0: i32, %arg1: i32, %arg2: memref<1x128x32xbf16, #tpu.memory_space<vmem>>, %arg3: memref<32x96xbf16, #tpu.memory_space<vmem>>, %arg4: memref<1x96xbf16, #tpu.memory_space<vmem>>, %arg5: memref<1x128x32xbf16, #tpu.memory_space<vmem>>, %arg6: memref<1x128x32xbf16, #tpu.memory_space<vmem>>, %arg7: memref<1x128x32xbf16, #tpu.memory_space<vmem>>) attributes {dimension_semantics = [#tpu.dimension_semantics<parallel>, #tpu.dimension_semantics<parallel>], iteration_bounds = array<i64: 2, 3>, scalar_prefetch = 0 : i64, scratch_operands = 0 : i64, tpu.core_type = #tpu.core_type<tc>, window_params = [{transform_indices = @transform_0, window_bounds = array<i64: 1, 128, 32>}, {pipeline_mode = #tpu.pipeline_mode<synchronous>, transform_indices = @transform_1, window_bounds = array<i64: 32, 96>}, {pipeline_mode = #tpu.pipeline_mode<synchronous>, transform_indices = @transform_2, window_bounds = array<i64: 1, 96>}, {transform_indices = @transform_3, window_bounds = array<i64: 1, 128, 32>}, {transform_indices = @transform_4, window_bounds = array<i64: 1, 128, 32>}, {transform_indices = @transform_5, window_bounds = array<i64: 1, 128, 32>}]} {
    %c0 = arith.constant 0 : index
    %c0_0 = arith.constant 0 : index
    %c0_1 = arith.constant 0 : index
    %0 = vector.load %arg2[%c0, %c0_0, %c0_1] : memref<1x128x32xbf16, #tpu.memory_space<vmem>>, vector<1x128x32xbf16>
    %1 = vector.shape_cast %0 : vector<1x128x32xbf16> to vector<128x32xbf16>
    %c0_2 = arith.constant 0 : index
    %c0_3 = arith.constant 0 : index
    %2 = vector.load %arg3[%c0_2, %c0_3] : memref<32x96xbf16, #tpu.memory_space<vmem>>, vector<32x96xbf16>
    %cst = arith.constant dense<0.000000e+00> : vector<128x96xf32>
    %3 = tpu.matmul %1, %2, %cst {dimension_numbers = #tpu.dot_dimension_numbers<[1], [0], [0], [1], [0, 0, 1, 1], [], []>} : vector<128x32xbf16>, vector<32x96xbf16>, vector<128x96xf32> -> vector<128x96xf32>
    %c0_4 = arith.constant 0 : index
    %c0_5 = arith.constant 0 : index
    %4 = vector.load %arg4[%c0_4, %c0_5] : memref<1x96xbf16, #tpu.memory_space<vmem>>, vector<1x96xbf16>
    %5 = arith.extf %4 : vector<1x96xbf16> to vector<1x96xf32>
    %6 = vector.broadcast %5 : vector<1x96xf32> to vector<128x96xf32>
    %7 = arith.addf %3, %6 : vector<128x96xf32>
    %8 = vector.extract_strided_slice %7 {offsets = [0, 0], sizes = [128, 32], strides = [1, 1]} : vector<128x96xf32> to vector<128x32xf32>
    %9 = arith.truncf %8 : vector<128x32xf32> to vector<128x32xbf16>
    %c0_6 = arith.constant 0 : index
    %c0_7 = arith.constant 0 : index
    %c0_8 = arith.constant 0 : index
    %10 = vector.load %arg5[%c0_6, %c0_7, %c0_8] : memref<1x128x32xbf16, #tpu.memory_space<vmem>>, vector<1x128x32xbf16>
    %11 = vector.shape_cast %10 : vector<1x128x32xbf16> to vector<128x32xbf16>
    %12 = vector.shape_cast %9 : vector<128x32xbf16> to vector<1x128x32xbf16>
    tpu.vector_store %arg5[%c0_6, %c0_7, %c0_8], %12 {strides = array<i32>} : memref<1x128x32xbf16, #tpu.memory_space<vmem>>, vector<1x128x32xbf16>,
    %13 = vector.extract_strided_slice %7 {offsets = [0, 32], sizes = [128, 32], strides = [1, 1]} : vector<128x96xf32> to vector<128x32xf32>
    %14 = arith.truncf %13 : vector<128x32xf32> to vector<128x32xbf16>
    %c0_9 = arith.constant 0 : index
    %c0_10 = arith.constant 0 : index
    %c0_11 = arith.constant 0 : index
    %15 = vector.load %arg6[%c0_9, %c0_10, %c0_11] : memref<1x128x32xbf16, #tpu.memory_space<vmem>>, vector<1x128x32xbf16>
    %16 = vector.shape_cast %15 : vector<1x128x32xbf16> to vector<128x32xbf16>
    %17 = vector.shape_cast %14 : vector<128x32xbf16> to vector<1x128x32xbf16>
    tpu.vector_store %arg6[%c0_9, %c0_10, %c0_11], %17 {strides = array<i32>} : memref<1x128x32xbf16, #tpu.memory_space<vmem>>, vector<1x128x32xbf16>,
    %18 = vector.extract_strided_slice %7 {offsets = [0, 64], sizes = [128, 32], strides = [1, 1]} : vector<128x96xf32> to vector<128x32xf32>
    %19 = arith.truncf %18 : vector<128x32xf32> to vector<128x32xbf16>
    %c0_12 = arith.constant 0 : index
    %c0_13 = arith.constant 0 : index
    %c0_14 = arith.constant 0 : index
    %20 = vector.load %arg7[%c0_12, %c0_13, %c0_14] : memref<1x128x32xbf16, #tpu.memory_space<vmem>>, vector<1x128x32xbf16>
    %21 = vector.shape_cast %20 : vector<1x128x32xbf16> to vector<128x32xbf16>
    %22 = vector.shape_cast %19 : vector<128x32xbf16> to vector<1x128x32xbf16>
    tpu.vector_store %arg7[%c0_12, %c0_13, %c0_14], %22 {strides = array<i32>} : memref<1x128x32xbf16, #tpu.memory_space<vmem>>, vector<1x128x32xbf16>,
    return
  }
  func.func @transform_0(%arg0: i32, %arg1: i32) -> (i32, i32, i32) {
    %c0_i32 = arith.constant 0 : i32
    %c0_i32_0 = arith.constant 0 : i32
    return %arg0, %arg1, %c0_i32 : i32, i32, i32
  }
  func.func @transform_1(%arg0: i32, %arg1: i32) -> (i32, i32) {
    %c0_i32 = arith.constant 0 : i32
    %c0_i32_0 = arith.constant 0 : i32
    %c0_i32_1 = arith.constant 0 : i32
    return %c0_i32, %c0_i32_0 : i32, i32
  }
  func.func @transform_2(%arg0: i32, %arg1: i32) -> (i32, i32) {
    %c0_i32 = arith.constant 0 : i32
    %c0_i32_0 = arith.constant 0 : i32
    %c0_i32_1 = arith.constant 0 : i32
    return %c0_i32, %c0_i32_0 : i32, i32
  }
  func.func @transform_3(%arg0: i32, %arg1: i32) -> (i32, i32, i32) {
    %c0_i32 = arith.constant 0 : i32
    %c0_i32_0 = arith.constant 0 : i32
    return %arg0, %arg1, %c0_i32 : i32, i32, i32
  }
  func.func @transform_4(%arg0: i32, %arg1: i32) -> (i32, i32, i32) {
    %c0_i32 = arith.constant 0 : i32
    %c0_i32_0 = arith.constant 0 : i32
    return %arg0, %arg1, %c0_i32 : i32, i32, i32
  }
  func.func @transform_5(%arg0: i32, %arg1: i32) -> (i32, i32, i32) {
    %c0_i32 = arith.constant 0 : i32
    %c0_i32_0 = arith.constant 0 : i32
    return %arg0, %arg1, %c0_i32 : i32, i32, i32
  }
}

</mosaic_0001>

<llo_original>
// kernel: tpu_custom_call.1
$region0: #{tpu_custom_call.1}
  #allocation0 [shape = 'u32[]', space=smem, size = 0x4, offset = 0x4, fixed_abs, tag = 'smem constant byte address 0x4 - core index']
  #allocation1 [shape = 'u32[72,128]{1,0:T(1,128)}', space=vmem, size = 0x9000, scoped, tag = 'internal scratch']
  %s0 = inlined_call_operand.vmem [shape: bf16[2,384,32], index: 0, kind: input, shape index: {}]
  %s1 = inlined_call_operand.vmem [shape: bf16[32,96], index: 1, kind: input, shape index: {}]
  %s2 = inlined_call_operand.vmem [shape: bf16[1,96], index: 2, kind: input, shape index: {}]
  %s3 = inlined_call_operand.vmem [shape: bf16[2,384,32], index: 3, kind: output, shape index: {0}]
  %s4 = inlined_call_operand.vmem [shape: bf16[2,384,32], index: 4, kind: output, shape index: {1}]
  %s5 = inlined_call_operand.vmem [shape: bf16[2,384,32], index: 5, kind: output, shape index: {2}]
  %6 = xla_tuple %s3, %s4, %s5
  %s7 = sld [smem:[#allocation0]]
  $region61: #{tpu_custom_call.1} parent=0
    _
  %s9 = ssub.s32 1, %s7
  %s10 = scalar_select 0, %s9, %s7
  loop: start=0, step=1, limit=8
  $region2: #{tpu_custom_call.1} parent=0 // loop_pre_header
    _
  $region3: #{tpu_custom_call.1} parent=0 // loop_header
    %s12 = sphi 0, %s16
    %p13 = scmp.ge.s32.totalorder %s12, 8
    %s19 = sphi 0, %s31
    %s20 = sphi 0, %s27
    %s21 = sphi 0, %s19
    %s22 = sphi 0, %s20
    %s23 = sphi 0, %s21
    %s24 = sphi 0, %s22
    %s36 = sphi 0, %s38
    %s39 = sphi 0, %s36
    %s40 = sphi 0, %s39
    %s56 = sphi 0, %s40
    %s60 = sphi 0, %s60
    %s62 = sphi 0, %s60
    %s63 = sphi 0, %s62
    %s77 = sphi 0, %s63
    %s81 = sphi 0, %s81
    %s83 = sphi 0, %s81
    %s84 = sphi 0, %s83
    %s98 = sphi 0, %s84
    %s106 = sphi 0, %s108
    %s109 = sphi 0, %s106
    %s110 = sphi 0, %s109
    %s126 = sphi 0, %s110
    %s134 = sphi 0, %s136
    %s137 = sphi 0, %s134
    %s138 = sphi 0, %s137
    %s154 = sphi 0, %s138
    %s162 = sphi 0, %s164
    %s165 = sphi 0, %s162
    %s166 = sphi 0, %s165
    %s182 = sphi 0, %s166
  $region4: #{tpu_custom_call.1} parent=0 // loop_header_branch
    %15 = sbr.rel (%p13) target = $region8
  $region5: #{tpu_custom_call.1} parent=0 // loop_body
    %s17 = ssub.s32 %s12, 1
    %s18 = ssub.s32 %s12, 2
    %s25 = sadd.s32 1, %s20
    %p26 = scmp.ge.s32.totalorder %s25, 3
    %s27 = scalar_select %p26, 0, %s25
    %s28 = sadd.s32 1, %s19
    %s29 = scalar_select %p26, %s28, %s19
    %p30 = scmp.ge.s32.totalorder %s29, 2
    %s31 = scalar_select %p30, 0, %s29
    %s32 = ssub.s32 %s19, %s31
    %s33 = ssub.s32 %s20, %s27
    %s34 = sor.u32 %s32, %s33
    %p35 = scmp.eq.s32.totalorder %s34, 0
    %s37 = sadd.s32 %s36, 1
    %s38 = scalar_select %p35, %s36, %s37
    %p41 = pneg %p35
    %p42 = scmp.eq.s32.totalorder %s12, 5
    %p43 = por %p41, %p42
    %p44 = scmp.ne.s32.totalorder %s36, %s39
    %p45 = scmp.eq.s32.totalorder %s12, 0
    %p46 = por %p44, %p45
    %p47 = scmp.ne.s32.totalorder %s36, %s39
    %p48 = scmp.eq.s32.totalorder %s17, 5
    %p49 = por %p47, %p48
    %p50 = scmp.ne.s32.totalorder %s39, %s40
    %p51 = scmp.eq.s32.totalorder %s17, 0
    %p52 = por %p50, %p51
    %p53 = scmp.ne.s32.totalorder %s39, %s40
    %p54 = scmp.eq.s32.totalorder %s18, 5
    %p55 = por %p53, %p54
    %p57 = scmp.ne.s32.totalorder %s40, %s56
    %p58 = scmp.eq.s32.totalorder %s18, 0
    %p59 = por %p57, %p58
    %s61 = sadd.s32 %s60, 1
    %p64 = scmp.eq.s32.totalorder %s12, 5
    %p65 = scmp.ne.s32.totalorder %s60, %s62
    %p66 = scmp.eq.s32.totalorder %s12, 0
    %p67 = por %p65, %p66
    %p68 = scmp.ne.s32.totalorder %s60, %s62
    %p69 = scmp.eq.s32.totalorder %s17, 5
    %p70 = por %p68, %p69
    %p71 = scmp.ne.s32.totalorder %s62, %s63
    %p72 = scmp.eq.s32.totalorder %s17, 0
    %p73 = por %p71, %p72
    %p74 = scmp.ne.s32.totalorder %s62, %s63
    %p75 = scmp.eq.s32.totalorder %s18, 5
    %p76 = por %p74, %p75
    %p78 = scmp.ne.s32.totalorder %s63, %s77
    %p79 = scmp.eq.s32.totalorder %s18, 0
    %p80 = por %p78, %p79
    %s82 = sadd.s32 %s81, 1
    %p85 = scmp.eq.s32.totalorder %s12, 5
    %p86 = scmp.ne.s32.totalorder %s81, %s83
    %p87 = scmp.eq.s32.totalorder %s12, 0
    %p88 = por %p86, %p87
    %p89 = scmp.ne.s32.totalorder %s81, %s83
    %p90 = scmp.eq.s32.totalorder %s17, 5
    %p91 = por %p89, %p90
    %p92 = scmp.ne.s32.totalorder %s83, %s84
    %p93 = scmp.eq.s32.totalorder %s17, 0
    %p94 = por %p92, %p93
    %p95 = scmp.ne.s32.totalorder %s83, %s84
    %p96 = scmp.eq.s32.totalorder %s18, 5
    %p97 = por %p95, %p96
    %p99 = scmp.ne.s32.totalorder %s84, %s98
    %p100 = scmp.eq.s32.totalorder %s18, 0
    %p101 = por %p99, %p100
    %s102 = ssub.s32 %s19, %s31
    %s103 = ssub.s32 %s20, %s27
    %s104 = sor.u32 %s102, %s103
    %p105 = scmp.eq.s32.totalorder %s104, 0
    %s107 = sadd.s32 %s106, 1
    %s108 = scalar_select %p105, %s106, %s107
    %p111 = pneg %p105
    %p112 = scmp.eq.s32.totalorder %s12, 5
    %p113 = por %p111, %p112
    %p114 = scmp.ne.s32.totalorder %s106, %s109
    %p115 = scmp.eq.s32.totalorder %s12, 0
    %p116 = por %p114, %p115
    %p117 = scmp.ne.s32.totalorder %s106, %s109
    %p118 = scmp.eq.s32.totalorder %s17, 5
    %p119 = por %p117, %p118
    %p120 = scmp.ne.s32.totalorder %s109, %s110
    %p121 = scmp.eq.s32.totalorder %s17, 0
    %p122 = por %p120, %p121
    %p123 = scmp.ne.s32.totalorder %s109, %s110
    %p124 = scmp.eq.s32.totalorder %s18, 5
    %p125 = por %p123, %p124
    %p127 = scmp.ne.s32.totalorder %s110, %s126
    %p128 = scmp.eq.s32.totalorder %s18, 0
    %p129 = por %p127, %p128
    %s130 = ssub.s32 %s19, %s31
    %s131 = ssub.s32 %s20, %s27
    %s132 = sor.u32 %s130, %s131
    %p133 = scmp.eq.s32.totalorder %s132, 0
    %s135 = sadd.s32 %s134, 1
    %s136 = scalar_select %p133, %s134, %s135
    %p139 = pneg %p133
    %p140 = scmp.eq.s32.totalorder %s12, 5
    %p141 = por %p139, %p140
    %p142 = scmp.ne.s32.totalorder %s134, %s137
    %p143 = scmp.eq.s32.totalorder %s12, 0
    %p144 = por %p142, %p143
    %p145 = scmp.ne.s32.totalorder %s134, %s137
    %p146 = scmp.eq.s32.totalorder %s17, 5
    %p147 = por %p145, %p146
    %p148 = scmp.ne.s32.totalorder %s137, %s138
    %p149 = scmp.eq.s32.totalorder %s17, 0
    %p150 = por %p148, %p149
    %p151 = scmp.ne.s32.totalorder %s137, %s138
    %p152 = scmp.eq.s32.totalorder %s18, 5
    %p153 = por %p151, %p152
    %p155 = scmp.ne.s32.totalorder %s138, %s154
    %p156 = scmp.eq.s32.totalorder %s18, 0
    %p157 = por %p155, %p156
    %s158 = ssub.s32 %s19, %s31
    %s159 = ssub.s32 %s20, %s27
    %s160 = sor.u32 %s158, %s159
    %p161 = scmp.eq.s32.totalorder %s160, 0
    %s163 = sadd.s32 %s162, 1
    %s164 = scalar_select %p161, %s162, %s163
    %p167 = pneg %p161
    %p168 = scmp.eq.s32.totalorder %s12, 5
    %p169 = por %p167, %p168
    %p170 = scmp.ne.s32.totalorder %s162, %s165
    %p171 = scmp.eq.s32.totalorder %s12, 0
    %p172 = por %p170, %p171
    %p173 = scmp.ne.s32.totalorder %s162, %s165
    %p174 = scmp.eq.s32.totalorder %s17, 5
    %p175 = por %p173, %p174
    %p176 = scmp.ne.s32.totalorder %s165, %s166
    %p177 = scmp.eq.s32.totalorder %s17, 0
    %p178 = por %p176, %p177
    %p179 = scmp.ne.s32.totalorder %s165, %s166
    %p180 = scmp.eq.s32.totalorder %s18, 5
    %p181 = por %p179, %p180
    %p183 = scmp.ne.s32.totalorder %s166, %s182
    %p184 = scmp.eq.s32.totalorder %s18, 0
    %p185 = por %p183, %p184
    %p186 = scmp.le.s32.totalorder 1, %s12
    %p187 = scmp.lt.s32.totalorder %s12, 7
    %p188 = pnand %p186, %p187
    %p189 = pneg %p188
    // Predicated region
    $region9: #{tpu_custom_call.1} parent=5 // pred_check
      _
    $region10: #{tpu_custom_call.1} parent=5 // pred_check_branch
      %191 = sbr.rel (%p188) target = $region12
    $region11: #{tpu_custom_call.1} parent=5 // pred_region
      %s192 = ssub.s32 %s12, 1
      // Predicated region
      $region13: #{tpu_custom_call.1} parent=11 // pred_check
        %p193 = pneg %p73
      $region14: #{tpu_custom_call.1} parent=11 // pred_check_branch
        %195 = sbr.rel (%p193) target = $region16
      $region15: #{tpu_custom_call.1} parent=11 // pred_region
        _
      $region16: #{tpu_custom_call.1} parent=11 // pred_fallthru
        _
      // Predicated region
      $region17: #{tpu_custom_call.1} parent=11 // pred_check
        %p196 = pneg %p94
      $region18: #{tpu_custom_call.1} parent=11 // pred_check_branch
        %198 = sbr.rel (%p196) target = $region20
      $region19: #{tpu_custom_call.1} parent=11 // pred_region
        _
      $region20: #{tpu_custom_call.1} parent=11 // pred_fallthru
        _
    $region12: #{tpu_custom_call.1} parent=5 // pred_fallthru
      _
    %p199 = scmp.lt.s32.totalorder %s12, 6
    // Predicated region
    $region21: #{tpu_custom_call.1} parent=5 // pred_check
      %p200 = pneg %p199
    $region22: #{tpu_custom_call.1} parent=5 // pred_check_branch
      %202 = sbr.rel (%p200) target = $region24
    $region23: #{tpu_custom_call.1} parent=5 // pred_region
      // Predicated region
      $region25: #{tpu_custom_call.1} parent=23 // pred_check
        %p203 = pneg %p46
      $region26: #{tpu_custom_call.1} parent=23 // pred_check_branch
        %205 = sbr.rel (%p203) target = $region28
      $region27: #{tpu_custom_call.1} parent=23 // pred_region
        %s206 = smul.u32 16, %s20
        %p207 = scmp.lt.s32.totalorder %s19, 1
        %s208 = scalar_select %p207, %s19, 1
        %p209 = scmp.lt.s32.totalorder %s206, 47
        %s210 = scalar_select %p209, %s206, 47
        %s211 = smul.addr %s208, 48
        %s212 = sadd.s32 %s210, %s211
        %s213 = smul.addr %s212, 4
        %s214 = scalar_lea.vmem %s0, %s213
        %s215 = smul.u32 16, %s20
      $region28: #{tpu_custom_call.1} parent=23 // pred_fallthru
        _
    $region24: #{tpu_custom_call.1} parent=5 // pred_fallthru
      _
    %p216 = scmp.le.s32.totalorder 1, %s12
    %p217 = scmp.lt.s32.totalorder %s12, 7
    %p218 = pnand %p216, %p217
    %p219 = pneg %p218
    // Predicated region
    $region29: #{tpu_custom_call.1} parent=5 // pred_check
      _
    $region30: #{tpu_custom_call.1} parent=5 // pred_check_branch
      %221 = sbr.rel (%p218) target = $region32
    $region31: #{tpu_custom_call.1} parent=5 // pred_region
      %s222 = ssub.s32 %s12, 1
      %s223 = smul.u32 16, %s22
      %p224 = scmp.lt.s32.totalorder %s21, 1
      %s225 = scalar_select %p224, %s21, 1
      %p226 = scmp.lt.s32.totalorder %s223, 47
      %s227 = scalar_select %p226, %s223, 47
      %s228 = smul.addr %s225, 48
      %s229 = sadd.s32 %s227, %s228
      %s230 = smul.addr %s229, 4
      %s231 = scalar_lea.vmem %s0, %s230
      %p232 = pneg %p52
      %p233 = pneg %p49
      %p234 = pneg %p73
      %p235 = pneg %p70
      %p236 = pneg %p94
      %p237 = pneg %p91
      %p238 = pneg %p122
      %p239 = pneg %p119
      %s240 = smul.u32 16, %s22
      %p241 = scmp.lt.s32.totalorder %s21, 1
      %s242 = scalar_select %p241, %s21, 1
      %p243 = scmp.lt.s32.totalorder %s240, 47
      %s244 = scalar_select %p243, %s240, 47
      %s245 = smul.addr %s242, 48
      %s246 = sadd.s32 %s244, %s245
      %s247 = smul.addr %s246, 4
      %s248 = scalar_lea.vmem %s3, %s247
      %p249 = pneg %p150
      %p250 = pneg %p147
      %s251 = smul.u32 16, %s22
      %p252 = scmp.lt.s32.totalorder %s21, 1
      %s253 = scalar_select %p252, %s21, 1
      %p254 = scmp.lt.s32.totalorder %s251, 47
      %s255 = scalar_select %p254, %s251, 47
      %s256 = smul.addr %s253, 48
      %s257 = sadd.s32 %s255, %s256
      %s258 = smul.addr %s257, 4
      %s259 = scalar_lea.vmem %s4, %s258
      %p260 = pneg %p178
      %p261 = pneg %p175
      %s262 = smul.u32 16, %s22
      %p263 = scmp.lt.s32.totalorder %s21, 1
      %s264 = scalar_select %p263, %s21, 1
      %p265 = scmp.lt.s32.totalorder %s262, 47
      %s266 = scalar_select %p265, %s262, 47
      %s267 = smul.addr %s264, 48
      %s268 = sadd.s32 %s266, %s267
      %s269 = smul.addr %s268, 4
      %s270 = scalar_lea.vmem %s5, %s269
      %s271 = smul.u32 16, %s22
      %p272 = scmp.lt.s32.totalorder %s21, 1
      %s273 = scalar_select %p272, %s21, 1
      %p274 = scmp.lt.s32.totalorder %s271, 47
      %s275 = scalar_select %p274, %s271, 47
      %s276 = smul.addr %s273, 48
      %s277 = sadd.s32 %s275, %s276
      %s278 = smul.addr %s277, 4
      %s279 = scalar_lea.vmem %s0, %s278
      %s280 = smul.u32 16, %s22
      %s281 = smul.u32 16, %s22
      %p282 = scmp.lt.s32.totalorder %s21, 1
      %s283 = scalar_select %p282, %s21, 1
      %p284 = scmp.lt.s32.totalorder %s281, 47
      %s285 = scalar_select %p284, %s281, 47
      %s286 = smul.addr %s283, 48
      %s287 = sadd.s32 %s285, %s286
      %s288 = smul.addr %s287, 4
      %s289 = scalar_lea.vmem %s3, %s288
      %s290 = smul.u32 16, %s22
      %s291 = smul.u32 16, %s22
      %p292 = scmp.lt.s32.totalorder %s21, 1
      %s293 = scalar_select %p292, %s21, 1
      %p294 = scmp.lt.s32.totalorder %s291, 47
      %s295 = scalar_select %p294, %s291, 47
      %s296 = smul.addr %s293, 48
      %s297 = sadd.s32 %s295, %s296
      %s298 = smul.addr %s297, 4
      %s299 = scalar_lea.vmem %s4, %s298
      %s300 = smul.u32 16, %s22
      %s301 = smul.u32 16, %s22
      %p302 = scmp.lt.s32.totalorder %s21, 1
      %s303 = scalar_select %p302, %s21, 1
      %p304 = scmp.lt.s32.totalorder %s301, 47
      %s305 = scalar_select %p304, %s301, 47
      %s306 = smul.addr %s303, 48
      %s307 = sadd.s32 %s305, %s306
      %s308 = smul.addr %s307, 4
      %s309 = scalar_lea.vmem %s5, %s308
      %s310 = smul.u32 16, %s22
      %v312 = vld [vmem:[%s279] sm:$0xf]
      %v313 = vld [vmem:[%s279 + $0x4] sm:$0xf]
      %v314 = vld [vmem:[%s279 + $0x8] sm:$0xf]
      %v315 = vld [vmem:[%s279 + $0xc] sm:$0xf]
      %v316 = vld [vmem:[%s279 + $0x10] sm:$0xf]
      %v317 = vld [vmem:[%s279 + $0x14] sm:$0xf]
      %v318 = vld [vmem:[%s279 + $0x18] sm:$0xf]
      %v319 = vld [vmem:[%s279 + $0x1c] sm:$0xf]
      %v320 = vld [vmem:[%s279 + $0x20] sm:$0xf]
      %v321 = vld [vmem:[%s279 + $0x24] sm:$0xf]
      %v322 = vld [vmem:[%s279 + $0x28] sm:$0xf]
      %v323 = vld [vmem:[%s279 + $0x2c] sm:$0xf]
      %v324 = vld [vmem:[%s279 + $0x30] sm:$0xf]
      %v325 = vld [vmem:[%s279 + $0x34] sm:$0xf]
      %v326 = vld [vmem:[%s279 + $0x38] sm:$0xf]
      %v327 = vld [vmem:[%s279 + $0x3c] sm:$0xf]
      %v328 = vld [vmem:[%s1] sm:$0xf]
      %v329 = vld [vmem:[%s1 + $0x4] sm:$0xf]
      %v330 = vld [vmem:[%s1 + $0x8] sm:$0xf]
      %v331 = vld [vmem:[%s1 + $0xc] sm:$0xf]
      %v332 = vld [vmem:[%s2] sm:$0x1]
      %v333 = vunpack.c.l.bf16 %v332
      %v334 = vperm.slane %v333, 0
      %v351 = vunpack.c.l.b16 %v312
      %v352 = vunpack.c.l.b16 %v313
      %v353 = vunpack.c.l.b16 %v314
      %v354 = vunpack.c.l.b16 %v315
      %v355 = vunpack.c.l.b16 %v316
      %v356 = vunpack.c.l.b16 %v317
      %v357 = vunpack.c.l.b16 %v318
      %v358 = vunpack.c.l.b16 %v319
      %v359 = vunpack.c.l.b16 %v320
      %v360 = vunpack.c.l.b16 %v321
      %v361 = vunpack.c.l.b16 %v322
      %v362 = vunpack.c.l.b16 %v323
      %v363 = vunpack.c.l.b16 %v324
      %v364 = vunpack.c.l.b16 %v325
      %v365 = vunpack.c.l.b16 %v326
      %v366 = vunpack.c.l.b16 %v327
      %v367 = vpack.c.b16 %v352, %v351
      %v368 = vpack.c.b16 %v354, %v353
      %v369 = vpack.c.b16 %v356, %v355
      %v370 = vpack.c.b16 %v358, %v357
      %v371 = vpack.c.b16 %v360, %v359
      %v372 = vpack.c.b16 %v362, %v361
      %v373 = vpack.c.b16 %v364, %v363
      %v374 = vpack.c.b16 %v366, %v365
      %v379 = vunpack.c.l.b16 %v328
      %v380 = vunpack.c.l.b16 %v329
      %v381 = vunpack.c.l.b16 %v330
      %v382 = vunpack.c.l.b16 %v331
      %v383 = vpack.c.b16 %v380, %v379
      %v384 = vpack.c.b16 %v382, %v381
      %vm387 = vcmask 261120
      %v389 = vsel %vm387, %v367, 0
      %v392 = vsel %vm387, %v368, 0
      %v395 = vsel %vm387, %v369, 0
      %v398 = vsel %vm387, %v370, 0
      %v401 = vsel %vm387, %v371, 0
      %v404 = vsel %vm387, %v372, 0
      %v407 = vsel %vm387, %v373, 0
      %v410 = vsel %vm387, %v374, 0
      %412 = vmatpush.bf16.msra.mxu0 0
      %413 = vmatpush.bf16.msra.mxu0 0
      %414 = vmatpush.bf16.msra.mxu0 0
      %415 = vmatpush.bf16.msra.mxu0 0
      %416 = vmatpush.bf16.msra.mxu0 0
      %417 = vmatpush.bf16.msra.mxu0 0
      %418 = vmatpush.bf16.msra.mxu0 %v384
      %419 = vmatpush.bf16.msra.mxu0 %v383
      %420 = vmatmul.bf16.gmra.mxu0 %v389
      %v421 = vpop.f32.mrf.mxu0
      %v422 = vadd.f32 %v334, %v421
      %v423 = vpop.f32.mrf.mxu0
      %v424 = vadd.f32 %v334, %v423
      %425 = vmatmul.bf16.gmra.mxu0 %v392
      %v426 = vpop.f32.mrf.mxu0
      %v427 = vadd.f32 %v334, %v426
      %v428 = vpop.f32.mrf.mxu0
      %v429 = vadd.f32 %v334, %v428
      %430 = vmatmul.bf16.gmra.mxu0 %v395
      %v431 = vpop.f32.mrf.mxu0
      %v432 = vadd.f32 %v334, %v431
      %v433 = vpop.f32.mrf.mxu0
      %v434 = vadd.f32 %v334, %v433
      %435 = vmatmul.bf16.gmra.mxu0 %v398
      %v436 = vpop.f32.mrf.mxu0
      %v437 = vadd.f32 %v334, %v436
      %v438 = vpop.f32.mrf.mxu0
      %v439 = vadd.f32 %v334, %v438
      %440 = vmatmul.bf16.gmra.mxu0 %v401
      %v441 = vpop.f32.mrf.mxu0
      %v442 = vadd.f32 %v334, %v441
      %v443 = vpop.f32.mrf.mxu0
      %v444 = vadd.f32 %v334, %v443
      %445 = vmatmul.bf16.gmra.mxu0 %v404
      %v446 = vpop.f32.mrf.mxu0
      %v447 = vadd.f32 %v334, %v446
      %v448 = vpop.f32.mrf.mxu0
      %v449 = vadd.f32 %v334, %v448
      %450 = vmatmul.bf16.gmra.mxu0 %v407
      %v451 = vpop.f32.mrf.mxu0
      %v452 = vadd.f32 %v334, %v451
      %v453 = vpop.f32.mrf.mxu0
      %v454 = vadd.f32 %v334, %v453
      %455 = vmatmul.bf16.gmra.mxu0 %v410
      %v456 = vpop.f32.mrf.mxu0
      %v457 = vadd.f32 %v334, %v456
      %v458 = vpop.f32.mrf.mxu0
      %v459 = vadd.f32 %v334, %v458
      %460 = vdwg.mxu0
      %v461 = vpack.c.bf16 %v422, %v422
      %v462 = vpack.c.bf16 %v424, %v424
      %v463 = vpack.c.bf16 %v427, %v427
      %v464 = vpack.c.bf16 %v429, %v429
      %v465 = vpack.c.bf16 %v432, %v432
      %v466 = vpack.c.bf16 %v434, %v434
      %v467 = vpack.c.bf16 %v437, %v437
      %v468 = vpack.c.bf16 %v439, %v439
      %v469 = vpack.c.bf16 %v442, %v442
      %v470 = vpack.c.bf16 %v444, %v444
      %v471 = vpack.c.bf16 %v447, %v447
      %v472 = vpack.c.bf16 %v449, %v449
      %v473 = vpack.c.bf16 %v452, %v452
      %v474 = vpack.c.bf16 %v454, %v454
      %v475 = vpack.c.bf16 %v457, %v457
      %v476 = vpack.c.bf16 %v459, %v459
      %vm477 = vcmask 257024
      %478 = vst.msk [vmem:[%s289] sm:$0xf] %vm477, %v461
      %479 = vst.msk [vmem:[%s289 + $0x4] sm:$0xf] %vm477, %v462
      %480 = vst.msk [vmem:[%s289 + $0x8] sm:$0xf] %vm477, %v463
      %481 = vst.msk [vmem:[%s289 + $0xc] sm:$0xf] %vm477, %v464
      %482 = vst.msk [vmem:[%s289 + $0x10] sm:$0xf] %vm477, %v465
      %483 = vst.msk [vmem:[%s289 + $0x14] sm:$0xf] %vm477, %v466
      %484 = vst.msk [vmem:[%s289 + $0x18] sm:$0xf] %vm477, %v467
      %485 = vst.msk [vmem:[%s289 + $0x1c] sm:$0xf] %vm477, %v468
      %486 = vst.msk [vmem:[%s289 + $0x20] sm:$0xf] %vm477, %v469
      %487 = vst.msk [vmem:[%s289 + $0x24] sm:$0xf] %vm477, %v470
      %488 = vst.msk [vmem:[%s289 + $0x28] sm:$0xf] %vm477, %v471
      %489 = vst.msk [vmem:[%s289 + $0x2c] sm:$0xf] %vm477, %v472
      %490 = vst.msk [vmem:[%s289 + $0x30] sm:$0xf] %vm477, %v473
      %491 = vst.msk [vmem:[%s289 + $0x34] sm:$0xf] %vm477, %v474
      %492 = vst.msk [vmem:[%s289 + $0x38] sm:$0xf] %vm477, %v475
      %493 = vst.msk [vmem:[%s289 + $0x3c] sm:$0xf] %vm477, %v476
      %510 = vrot.lane.b32.xlu0 %v461, 96
      %v511 = vpop.permute.xlu0 %510
      %512 = vrot.lane.b32.xlu0 %v462, 96
      %v513 = vpop.permute.xlu0 %512
      %514 = vrot.lane.b32.xlu0 %v463, 96
      %v515 = vpop.permute.xlu0 %514
      %516 = vrot.lane.b32.xlu0 %v464, 96
      %v517 = vpop.permute.xlu0 %516
      %518 = vrot.lane.b32.xlu0 %v465, 96
      %v519 = vpop.permute.xlu0 %518
      %520 = vrot.lane.b32.xlu0 %v466, 96
      %v521 = vpop.permute.xlu0 %520
      %522 = vrot.lane.b32.xlu0 %v467, 96
      %v523 = vpop.permute.xlu0 %522
      %524 = vrot.lane.b32.xlu0 %v468, 96
      %v525 = vpop.permute.xlu0 %524
      %526 = vrot.lane.b32.xlu0 %v469, 96
      %v527 = vpop.permute.xlu0 %526
      %528 = vrot.lane.b32.xlu0 %v470, 96
      %v529 = vpop.permute.xlu0 %528
      %530 = vrot.lane.b32.xlu0 %v471, 96
      %v531 = vpop.permute.xlu0 %530
      %532 = vrot.lane.b32.xlu0 %v472, 96
      %v533 = vpop.permute.xlu0 %532
      %534 = vrot.lane.b32.xlu0 %v473, 96
      %v535 = vpop.permute.xlu0 %534
      %536 = vrot.lane.b32.xlu0 %v474, 96
      %v537 = vpop.permute.xlu0 %536
      %538 = vrot.lane.b32.xlu0 %v475, 96
      %v539 = vpop.permute.xlu0 %538
      %540 = vrot.lane.b32.xlu0 %v476, 96
      %v541 = vpop.permute.xlu0 %540
      %558 = vst.msk [vmem:[%s299] sm:$0xf] %vm477, %v511
      %559 = vst.msk [vmem:[%s299 + $0x4] sm:$0xf] %vm477, %v513
      %560 = vst.msk [vmem:[%s299 + $0x8] sm:$0xf] %vm477, %v515
      %561 = vst.msk [vmem:[%s299 + $0xc] sm:$0xf] %vm477, %v517
      %562 = vst.msk [vmem:[%s299 + $0x10] sm:$0xf] %vm477, %v519
      %563 = vst.msk [vmem:[%s299 + $0x14] sm:$0xf] %vm477, %v521
      %564 = vst.msk [vmem:[%s299 + $0x18] sm:$0xf] %vm477, %v523
      %565 = vst.msk [vmem:[%s299 + $0x1c] sm:$0xf] %vm477, %v525
      %566 = vst.msk [vmem:[%s299 + $0x20] sm:$0xf] %vm477, %v527
      %567 = vst.msk [vmem:[%s299 + $0x24] sm:$0xf] %vm477, %v529
      %568 = vst.msk [vmem:[%s299 + $0x28] sm:$0xf] %vm477, %v531
      %569 = vst.msk [vmem:[%s299 + $0x2c] sm:$0xf] %vm477, %v533
      %570 = vst.msk [vmem:[%s299 + $0x30] sm:$0xf] %vm477, %v535
      %571 = vst.msk [vmem:[%s299 + $0x34] sm:$0xf] %vm477, %v537
      %572 = vst.msk [vmem:[%s299 + $0x38] sm:$0xf] %vm477, %v539
      %573 = vst.msk [vmem:[%s299 + $0x3c] sm:$0xf] %vm477, %v541
      %574 = vrot.lane.b32.xlu0 %v461, 64
      %v575 = vpop.permute.xlu0 %574
      %576 = vrot.lane.b32.xlu0 %v462, 64
      %v577 = vpop.permute.xlu0 %576
      %578 = vrot.lane.b32.xlu0 %v463, 64
      %v579 = vpop.permute.xlu0 %578
      %580 = vrot.lane.b32.xlu0 %v464, 64
      %v581 = vpop.permute.xlu0 %580
      %582 = vrot.lane.b32.xlu0 %v465, 64
      %v583 = vpop.permute.xlu0 %582
      %584 = vrot.lane.b32.xlu0 %v466, 64
      %v585 = vpop.permute.xlu0 %584
      %586 = vrot.lane.b32.xlu0 %v467, 64
      %v587 = vpop.permute.xlu0 %586
      %588 = vrot.lane.b32.xlu0 %v468, 64
      %v589 = vpop.permute.xlu0 %588
      %590 = vrot.lane.b32.xlu0 %v469, 64
      %v591 = vpop.permute.xlu0 %590
      %592 = vrot.lane.b32.xlu0 %v470, 64
      %v593 = vpop.permute.xlu0 %592
      %594 = vrot.lane.b32.xlu0 %v471, 64
      %v595 = vpop.permute.xlu0 %594
      %596 = vrot.lane.b32.xlu0 %v472, 64
      %v597 = vpop.permute.xlu0 %596
      %598 = vrot.lane.b32.xlu0 %v473, 64
      %v599 = vpop.permute.xlu0 %598
      %600 = vrot.lane.b32.xlu0 %v474, 64
      %v601 = vpop.permute.xlu0 %600
      %602 = vrot.lane.b32.xlu0 %v475, 64
      %v603 = vpop.permute.xlu0 %602
      %604 = vrot.lane.b32.xlu0 %v476, 64
      %v605 = vpop.permute.xlu0 %604
      %622 = vst.msk [vmem:[%s309] sm:$0xf] %vm477, %v575
      %623 = vst.msk [vmem:[%s309 + $0x4] sm:$0xf] %vm477, %v577
      %624 = vst.msk [vmem:[%s309 + $0x8] sm:$0xf] %vm477, %v579
      %625 = vst.msk [vmem:[%s309 + $0xc] sm:$0xf] %vm477, %v581
      %626 = vst.msk [vmem:[%s309 + $0x10] sm:$0xf] %vm477, %v583
      %627 = vst.msk [vmem:[%s309 + $0x14] sm:$0xf] %vm477, %v585
      %628 = vst.msk [vmem:[%s309 + $0x18] sm:$0xf] %vm477, %v587
      %629 = vst.msk [vmem:[%s309 + $0x1c] sm:$0xf] %vm477, %v589
      %630 = vst.msk [vmem:[%s309 + $0x20] sm:$0xf] %vm477, %v591
      %631 = vst.msk [vmem:[%s309 + $0x24] sm:$0xf] %vm477, %v593
      %632 = vst.msk [vmem:[%s309 + $0x28] sm:$0xf] %vm477, %v595
      %633 = vst.msk [vmem:[%s309 + $0x2c] sm:$0xf] %vm477, %v597
      %634 = vst.msk [vmem:[%s309 + $0x30] sm:$0xf] %vm477, %v599
      %635 = vst.msk [vmem:[%s309 + $0x34] sm:$0xf] %vm477, %v601
      %636 = vst.msk [vmem:[%s309 + $0x38] sm:$0xf] %vm477, %v603
      %637 = vst.msk [vmem:[%s309 + $0x3c] sm:$0xf] %vm477, %v605
      %s638 = smul.u32 16, %s22
      %p639 = scmp.lt.s32.totalorder %s21, 1
      %s640 = scalar_select %p639, %s21, 1
      %p641 = scmp.lt.s32.totalorder %s638, 47
      %s642 = scalar_select %p641, %s638, 47
      %s643 = smul.addr %s640, 48
      %s644 = sadd.s32 %s642, %s643
      %s645 = smul.addr %s644, 4
      %s646 = scalar_lea.vmem %s3, %s645
      %s647 = smul.u32 16, %s22
      %p648 = scmp.lt.s32.totalorder %s21, 1
      %s649 = scalar_select %p648, %s21, 1
      %p650 = scmp.lt.s32.totalorder %s647, 47
      %s651 = scalar_select %p650, %s647, 47
      %s652 = smul.addr %s649, 48
      %s653 = sadd.s32 %s651, %s652
      %s654 = smul.addr %s653, 4
      %s655 = scalar_lea.vmem %s4, %s654
      %s656 = smul.u32 16, %s22
      %p657 = scmp.lt.s32.totalorder %s21, 1
      %s658 = scalar_select %p657, %s21, 1
      %p659 = scmp.lt.s32.totalorder %s656, 47
      %s660 = scalar_select %p659, %s656, 47
      %s661 = smul.addr %s658, 48
      %s662 = sadd.s32 %s660, %s661
      %s663 = smul.addr %s662, 4
      %s664 = scalar_lea.vmem %s5, %s663
      // Predicated region
      $region33: #{tpu_custom_call.1} parent=31 // pred_check
        %p665 = pneg %p119
      $region34: #{tpu_custom_call.1} parent=31 // pred_check_branch
        %667 = sbr.rel (%p665) target = $region36
      $region35: #{tpu_custom_call.1} parent=31 // pred_region
        %s668 = smul.u32 16, %s22
      $region36: #{tpu_custom_call.1} parent=31 // pred_fallthru
        _
      // Predicated region
      $region37: #{tpu_custom_call.1} parent=31 // pred_check
        %p669 = pneg %p147
      $region38: #{tpu_custom_call.1} parent=31 // pred_check_branch
        %671 = sbr.rel (%p669) target = $region40
      $region39: #{tpu_custom_call.1} parent=31 // pred_region
        %s672 = smul.u32 16, %s22
      $region40: #{tpu_custom_call.1} parent=31 // pred_fallthru
        _
      // Predicated region
      $region41: #{tpu_custom_call.1} parent=31 // pred_check
        %p673 = pneg %p175
      $region42: #{tpu_custom_call.1} parent=31 // pred_check_branch
        %675 = sbr.rel (%p673) target = $region44
      $region43: #{tpu_custom_call.1} parent=31 // pred_region
        %s676 = smul.u32 16, %s22
      $region44: #{tpu_custom_call.1} parent=31 // pred_fallthru
        _
    $region32: #{tpu_custom_call.1} parent=5 // pred_fallthru
      _
    %p677 = scmp.le.s32.totalorder 2, %s12
    // Predicated region
    $region45: #{tpu_custom_call.1} parent=5 // pred_check
      %p678 = pneg %p677
    $region46: #{tpu_custom_call.1} parent=5 // pred_check_branch
      %680 = sbr.rel (%p678) target = $region48
    $region47: #{tpu_custom_call.1} parent=5 // pred_region
      %s681 = ssub.s32 %s12, 2
      // Predicated region
      $region49: #{tpu_custom_call.1} parent=47 // pred_check
        %p682 = pneg %p125
      $region50: #{tpu_custom_call.1} parent=47 // pred_check_branch
        %684 = sbr.rel (%p682) target = $region52
      $region51: #{tpu_custom_call.1} parent=47 // pred_region
        %s685 = smul.u32 16, %s24
        %p686 = scmp.lt.s32.totalorder %s23, 1
        %s687 = scalar_select %p686, %s23, 1
        %p688 = scmp.lt.s32.totalorder %s685, 47
        %s689 = scalar_select %p688, %s685, 47
        %s690 = smul.addr %s687, 48
        %s691 = sadd.s32 %s689, %s690
        %s692 = smul.addr %s691, 4
        %s693 = scalar_lea.vmem %s3, %s692
      $region52: #{tpu_custom_call.1} parent=47 // pred_fallthru
        _
      // Predicated region
      $region53: #{tpu_custom_call.1} parent=47 // pred_check
        %p694 = pneg %p153
      $region54: #{tpu_custom_call.1} parent=47 // pred_check_branch
        %696 = sbr.rel (%p694) target = $region56
      $region55: #{tpu_custom_call.1} parent=47 // pred_region
        %s697 = smul.u32 16, %s24
        %p698 = scmp.lt.s32.totalorder %s23, 1
        %s699 = scalar_select %p698, %s23, 1
        %p700 = scmp.lt.s32.totalorder %s697, 47
        %s701 = scalar_select %p700, %s697, 47
        %s702 = smul.addr %s699, 48
        %s703 = sadd.s32 %s701, %s702
        %s704 = smul.addr %s703, 4
        %s705 = scalar_lea.vmem %s4, %s704
      $region56: #{tpu_custom_call.1} parent=47 // pred_fallthru
        _
      // Predicated region
      $region57: #{tpu_custom_call.1} parent=47 // pred_check
        %p706 = pneg %p181
      $region58: #{tpu_custom_call.1} parent=47 // pred_check_branch
        %708 = sbr.rel (%p706) target = $region60
      $region59: #{tpu_custom_call.1} parent=47 // pred_region
        %s709 = smul.u32 16, %s24
        %p710 = scmp.lt.s32.totalorder %s23, 1
        %s711 = scalar_select %p710, %s23, 1
        %p712 = scmp.lt.s32.totalorder %s709, 47
        %s713 = scalar_select %p712, %s709, 47
        %s714 = smul.addr %s711, 48
        %s715 = sadd.s32 %s713, %s714
        %s716 = smul.addr %s715, 4
        %s717 = scalar_lea.vmem %s5, %s716
      $region60: #{tpu_custom_call.1} parent=47 // pred_fallthru
        _
    $region48: #{tpu_custom_call.1} parent=5 // pred_fallthru
      _
  $region6: #{tpu_custom_call.1} parent=0 // loop_footer
    %s16 = sadd.s32 1, %s12
  $region7: #{tpu_custom_call.1} parent=0 // loop_footer_branch
    %11 = sbr.rel target = $region3
  $region8: #{tpu_custom_call.1} parent=0 // loop_exit
    _

</llo_original>
